<compile_context>
chip_gen: v7x
topology: tpu7x:2x2x1
jax: 0.10.0
libtpu: 0.0.40
codegen_flags: <defaults>
</compile_context>

<pallas_src>
import functools

import jax
import jax.numpy as jnp
from jax import lax
from jax.experimental import pallas as pl
from jax.experimental.pallas import tpu as pltpu

NEG_SLOPE = 0.01  # torch.nn.functional.leaky_relu default negative_slope


def _round_up(x, m):
    return ((x + m - 1) // m) * m


def _pick_vmem_limit_bytes():
    # v5e/v6e have 128 MiB physical VMEM -> allow 64 MiB scoped; v7x has 64 MiB -> keep 32 MiB.
    try:
        phys = getattr(pltpu.get_tpu_info(), "vmem_capacity_bytes", None)
        if phys:
            return int(min(64 * 1024 * 1024, max(32 * 1024 * 1024, phys // 2)))
    except Exception:
        pass
    return 32 * 1024 * 1024


# -----------------------------------------------------------------------------------------
# Stage 1 (node kernel):
#   hyzT[:, tile] = W2_fold( leaky_relu( W1 @ xT + b1 ) ) + [b2; 0]        -> (4, TN)
# -----------------------------------------------------------------------------------------
def _node_kernel(xT_ref, w1T_ref, b1_ref, w2c_ref, b2c_ref, hyz_ref):
    xT = xT_ref[...]                      # (IN, TN) f32, nodes on lanes
    w1T = w1T_ref[...]                    # (5, IN)  f32
    b1 = b1_ref[...]                      # (5, 1)   f32
    in_dim, tn = xT.shape

    if in_dim <= 16:
        # Tiny contraction depth: VPU broadcast multiply-add (avoids MXU push/drain latency
        # for a 1/128-deep matmul).  Static unroll over IN.
        hT = jnp.broadcast_to(b1, (5, tn))
        for i in range(in_dim):
            hT = hT + w1T[:, i:i + 1] * xT[i:i + 1, :]
    else:
        hT = jnp.dot(w1T, xT, preferred_element_type=jnp.float32) + b1

    # dropout(p=0) == identity; leaky_relu
    hT = jnp.where(hT > 0, hT, NEG_SLOPE * hT)        # (5, TN)

    # Fold linear2 into the node features (contraction depth 5 -> VPU MAC):
    #   rows 0:2 = (h @ W2[0:5])^T + b2 = hy^T + b2,  rows 2:4 = (h @ W2[5:10])^T = hz^T
    w2c = w2c_ref[...]                    # (4, 5) f32
    b2c = b2c_ref[...]                    # (4, 1) f32  (b2 in rows 0:2, zeros in rows 2:4)
    hyz = jnp.broadcast_to(b2c, (4, tn))
    for k in range(5):
        hyz = hyz + w2c[:, k:k + 1] * hT[k:k + 1, :]
    hyz_ref[...] = hyz.astype(hyz_ref.dtype)          # (4, TN), stored in gather_dtype


# -----------------------------------------------------------------------------------------
# Stage 2 (edge kernel):  outT[:, edge_tile] = (hy^T + b2) gather(dst) + hz^T gather(src)
# Gather = one-hot matmul (f32 accumulation), looped over node chunks.
# -----------------------------------------------------------------------------------------
def _edge_kernel(ei_ref, hyz_ref, out_ref, *, node_chunk, num_node_chunks, gather_dtype):
    src = ei_ref[0:1, :]                  # (1, TE)  edge_index[0] -> z -> hz rows 2:4
    dst = ei_ref[1:2, :]                  # (1, TE)  edge_index[1] -> y -> hy rows 0:2
    te = ei_ref.shape[1]

    # Hoisted: one (node_chunk, TE) iota per edge tile; per-chunk re-basing is a (1, TE)
    # scalar subtract on the index rows (JAX does not CSE broadcast_in_dim across iters).
    niota = lax.broadcasted_iota(jnp.int32, (node_chunk, te), 0)

    def partial_sum(chunk_idx, acc):
        start = pl.multiple_of(chunk_idx * node_chunk, node_chunk)
        hyz = hyz_ref[:, pl.ds(start, node_chunk)]                     # (4, node_chunk), gather_dtype
        oh_dst = (niota == (dst - start)).astype(gather_dtype)         # (node_chunk, TE)
        oh_src = (niota == (src - start)).astype(gather_dtype)
        # One-hot selection is exact; accumulation stays f32.
        return (acc
                + jnp.dot(hyz[0:2, :], oh_dst, preferred_element_type=jnp.float32)
                + jnp.dot(hyz[2:4, :], oh_src, preferred_element_type=jnp.float32))

    if num_node_chunks == 1:
        acc = partial_sum(0, jnp.zeros((2, te), jnp.float32))
    else:
        acc = lax.fori_loop(0, num_node_chunks, partial_sum,
                            jnp.zeros((2, te), jnp.float32),
                            unroll=num_node_chunks <= 8)

    out_ref[...] = acc                     # (2, TE) f32, unmasked lane-dense store


# -----------------------------------------------------------------------------------------
# Wrapper
# -----------------------------------------------------------------------------------------
def net_lin_forward(x, edge_index, w1, b1, w2, b2, *,
                    tile_e=1024, node_chunk=256, stage1_node_tile=2048,
                    gather_dtype=jnp.bfloat16):
    """x: (N, IN) float, edge_index: (2, E) int.

    Parameters use the `y = x @ W + b` convention: w1 (IN, 5), b1 (5,), w2 (10, 2), b2 (2,).
    Returns (out, out) with out: (E, 2) float32, matching Net_Lin.forward.

    gather_dtype=bfloat16 (default, fast) rounds the node features once before the per-edge
    add (~1e-2 relative error); use gather_dtype=jnp.float32 for strict f32 parity.
    """
    assert tile_e % 128 == 0 and node_chunk % 128 == 0 and stage1_node_tile % 128 == 0

    x = jnp.asarray(x, jnp.float32)
    n_nodes, in_dim = x.shape
    n_edges = edge_index.shape[1]
    if n_edges > 0 and n_nodes == 0:
        raise ValueError("edge_index references nodes but x has no rows")

    # Stage-1 tile (large, amortizes grid-step overhead) decoupled from the edge-stage
    # inner node chunk (small, bounds vreg/spill pressure); both lane-aligned.
    tile_n1 = min(stage1_node_tile, _round_up(max(n_nodes, 1), node_chunk))
    tile_n1 = _round_up(tile_n1, node_chunk)
    np_nodes = _round_up(max(n_nodes, 1), tile_n1)        # multiple of node_chunk too
    ep_edges = _round_up(max(n_edges, 1), tile_e)
    num_node_chunks = -(-max(n_nodes, 1) // node_chunk)   # edge stage ignores node padding

    # Lane-dense, padded inputs (padding nodes are never referenced by valid edge indices;
    # padding edges point at node 0 and are sliced away below).
    xT = jnp.zeros((in_dim, np_nodes), jnp.float32).at[:, :n_nodes].set(x.T)
    ei = jnp.zeros((2, ep_edges), jnp.int32).at[:, :n_edges].set(
        jnp.asarray(edge_index, jnp.int32))

    w1T = jnp.asarray(w1, jnp.float32).T                              # (5, IN)
    b1c = jnp.asarray(b1, jnp.float32).reshape(5, 1)
    w2f = jnp.asarray(w2, jnp.float32)                                # (10, 2)
    w2c = jnp.concatenate([w2f[0:5, :].T, w2f[5:10, :].T], axis=0)    # (4, 5)
    b2c4 = jnp.concatenate([jnp.asarray(b2, jnp.float32).reshape(2, 1),
                            jnp.zeros((2, 1), jnp.float32)], axis=0)  # (4, 1): b2 folded into hy

    cparams = pltpu.CompilerParams(
        dimension_semantics=("parallel",),           # shards tiles across TCs on v7x megacore
        vmem_limit_bytes=_pick_vmem_limit_bytes(),   # 64 MiB v5e/v6e, 32 MiB v7x
    )

    # ---- stage 1: per-node-tile linear1 + leaky_relu + W2/b2 fold -> (4, Np) gather_dtype ---
    hyzT = pl.pallas_call(
        _node_kernel,
        out_shape=jax.ShapeDtypeStruct((4, np_nodes), gather_dtype),
        grid=(np_nodes // tile_n1,),
        in_specs=[
            pl.BlockSpec((in_dim, tile_n1), lambda i: (0, i)),
            pl.BlockSpec((5, in_dim), lambda i: (0, 0)),
            pl.BlockSpec((5, 1), lambda i: (0, 0)),
            pl.BlockSpec((4, 5), lambda i: (0, 0)),
            pl.BlockSpec((4, 1), lambda i: (0, 0)),
        ],
        out_specs=pl.BlockSpec((4, tile_n1), lambda i: (0, i)),
        compiler_params=cparams,
    )(xT, w1T, b1c, w2c, b2c4)

    # ---- stage 2: per-edge-tile gather + add, lane-dense output (2, Ep) f32 ---------------
    edge_kernel = functools.partial(
        _edge_kernel, node_chunk=node_chunk, num_node_chunks=num_node_chunks,
        gather_dtype=gather_dtype)

    def _run_stage2(hyz_spec):
        return pl.pallas_call(
            edge_kernel,
            out_shape=jax.ShapeDtypeStruct((2, ep_edges), jnp.float32),
            grid=(ep_edges // tile_e,),
            in_specs=[
                pl.BlockSpec((2, tile_e), lambda e: (0, e)),   # edge-index tile (pipelined)
                hyz_spec,                                      # hy/hz slab, resident
            ],
            out_specs=pl.BlockSpec((2, tile_e), lambda e: (0, e)),
            compiler_params=cparams,
        )(ei, hyzT)

    try:
        # Resident slab with a constant index_map: single-buffer it to halve its VMEM cost.
        outT = _run_stage2(pl.BlockSpec((4, np_nodes), lambda e: (0, 0),
                                        pipeline_mode=pl.Buffered(1)))
    except Exception:
        # Fallback if this Pallas build rejects buffer_count=1 on a pipelined input.
        outT = _run_stage2(pl.BlockSpec((4, np_nodes), lambda e: (0, 0)))

    out = outT[:, :n_edges].T                                  # (E, 2)
    return out, out


# -----------------------------------------------------------------------------------------
# Reference + self-test
# -----------------------------------------------------------------------------------------
def _reference(x, edge_index, w1, b1, w2, b2):
    h = x @ w1 + b1.reshape(1, 5)
    h = jnp.where(h > 0, h, NEG_SLOPE * h)
    z = h[edge_index[0], :]
    y = h[edge_index[1], :]
    cat = jnp.concatenate([y, z], axis=1)
    return cat @ w2 + b2.reshape(1, 2)


if __name__ == "__main__":
    key = jax.random.PRNGKey(0)
    k_x, k_e, k_w1, k_b1, k_w2, k_b2, k_x2, k_e2, k_w1b = jax.random.split(key, 9)

    # ---- primary test: module defaults (input_size=1), small graph ---------------------
    N, IN, E = 37, 1, 23
    x = jax.random.normal(k_x, (N, IN), dtype=jnp.float32)
    edge_index = jax.random.randint(k_e, (2, E), 0, N, dtype=jnp.int32)
    w1 = jax.random.normal(k_w1, (IN, 5), dtype=jnp.float32) * 0.5
    b1 = jax.random.normal(k_b1, (5,), dtype=jnp.float32) * 0.1
    w2 = jax.random.normal(k_w2, (10, 2), dtype=jnp.float32) * 0.5
    b2 = jax.random.normal(k_b2, (2,), dtype=jnp.float32) * 0.1

    ref = _reference(x, edge_index, w1, b1, w2, b2)

    out, out2 = net_lin_forward(x, edge_index, w1, b1, w2, b2)   # default bf16 gather path
    out = jax.block_until_ready(out)
    assert out.shape == (E, 2)
    assert jnp.array_equal(out, out2)
    assert jnp.allclose(out, ref, atol=3e-2, rtol=3e-2), "bf16 gather path mismatch vs reference"

    # strict check with a full-f32 node-feature / gather path
    out_f32, _ = net_lin_forward(x, edge_index, w1, b1, w2, b2, gather_dtype=jnp.float32)
    out_f32 = jax.block_until_ready(out_f32)
    assert jnp.allclose(out_f32, ref, atol=1e-4, rtol=1e-4), "f32 gather path mismatch vs reference"

    # ---- secondary test: multi-tile grids (node-chunk loop, multi-step stage-1/edge grids) -
    N2, IN2, E2 = 600, 3, 2500
    x2 = jax.random.normal(k_x2, (N2, IN2), dtype=jnp.float32)
    edge_index2 = jax.random.randint(k_e2, (2, E2), 0, N2, dtype=jnp.int32)
    w1b = jax.random.normal(k_w1b, (IN2, 5), dtype=jnp.float32) * 0.5
    ref_b = _reference(x2, edge_index2, w1b, b1, w2, b2)

    out_b, _ = net_lin_forward(x2, edge_index2, w1b, b1, w2, b2,
                               tile_e=1024, node_chunk=256, stage1_node_tile=256,
                               gather_dtype=jnp.float32)
    out_b = jax.block_until_ready(out_b)
    assert out_b.shape == (E2, 2)
    assert jnp.allclose(out_b, ref_b, atol=1e-4, rtol=1e-4), "tiled f32 path mismatch vs reference"

    out_c, _ = net_lin_forward(x2, edge_index2, w1b, b1, w2, b2,
                               tile_e=1024, node_chunk=256, stage1_node_tile=256)
    out_c = jax.block_until_ready(out_c)
    assert jnp.allclose(out_c, ref_b, atol=3e-2, rtol=3e-2), "tiled bf16 path mismatch vs reference"

    print("KERNEL_OK")
</pallas_src>

<mosaic_0001>
module attributes {stable_mosaic.version = 11 : i64} {
  func.func @_node_kernel(%arg0: i32, %arg1: memref<1x256xf32, #tpu.memory_space<vmem>>, %arg2: memref<5x1xf32, #tpu.memory_space<vmem>>, %arg3: memref<5x1xf32, #tpu.memory_space<vmem>>, %arg4: memref<4x5xf32, #tpu.memory_space<vmem>>, %arg5: memref<4x1xf32, #tpu.memory_space<vmem>>, %arg6: memref<4x256xbf16, #tpu.memory_space<vmem>>) attributes {dimension_semantics = [#tpu.dimension_semantics<parallel>], iteration_bounds = array<i64: 1>, scalar_prefetch = 0 : i64, scratch_operands = 0 : i64, tpu.core_type = #tpu.core_type<tc>, window_params = [{transform_indices = @transform_0, window_bounds = array<i64: 1, 256>}, {pipeline_mode = #tpu.pipeline_mode<synchronous>, transform_indices = @transform_1, window_bounds = array<i64: 5, 1>}, {pipeline_mode = #tpu.pipeline_mode<synchronous>, transform_indices = @transform_2, window_bounds = array<i64: 5, 1>}, {pipeline_mode = #tpu.pipeline_mode<synchronous>, transform_indices = @transform_3, window_bounds = array<i64: 4, 5>}, {pipeline_mode = #tpu.pipeline_mode<synchronous>, transform_indices = @transform_4, window_bounds = array<i64: 4, 1>}, {transform_indices = @transform_5, window_bounds = array<i64: 4, 256>}]} {
    %c0 = arith.constant 0 : index
    %c0_0 = arith.constant 0 : index
    %0 = vector.load %arg1[%c0, %c0_0] : memref<1x256xf32, #tpu.memory_space<vmem>>, vector<1x256xf32>
    %c0_1 = arith.constant 0 : index
    %c0_2 = arith.constant 0 : index
    %1 = vector.load %arg2[%c0_1, %c0_2] : memref<5x1xf32, #tpu.memory_space<vmem>>, vector<5x1xf32>
    %c0_3 = arith.constant 0 : index
    %c0_4 = arith.constant 0 : index
    %2 = vector.load %arg3[%c0_3, %c0_4] : memref<5x1xf32, #tpu.memory_space<vmem>>, vector<5x1xf32>
    %3 = vector.shape_cast %2 : vector<5x1xf32> to vector<5x1xf32>
    %4 = vector.broadcast %3 : vector<5x1xf32> to vector<5x256xf32>
    %5 = vector.broadcast %1 : vector<5x1xf32> to vector<5x256xf32>
    %6 = vector.broadcast %0 : vector<1x256xf32> to vector<5x256xf32>
    %7 = arith.mulf %5, %6 : vector<5x256xf32>
    %8 = arith.addf %4, %7 : vector<5x256xf32>
    %cst = arith.constant 0.000000e+00 : f32
    %9 = vector.broadcast %cst : f32 to vector<5x256xf32>
    %10 = arith.cmpf ogt, %8, %9 : vector<5x256xf32>
    %cst_5 = arith.constant 0.00999999977 : f32
    %11 = vector.broadcast %cst_5 : f32 to vector<5x256xf32>
    %12 = arith.mulf %11, %8 : vector<5x256xf32>
    %13 = arith.select %10, %8, %12 : vector<5x256xi1>, vector<5x256xf32>
    %c0_6 = arith.constant 0 : index
    %c0_7 = arith.constant 0 : index
    %14 = vector.load %arg4[%c0_6, %c0_7] : memref<4x5xf32, #tpu.memory_space<vmem>>, vector<4x5xf32>
    %c0_8 = arith.constant 0 : index
    %c0_9 = arith.constant 0 : index
    %15 = vector.load %arg5[%c0_8, %c0_9] : memref<4x1xf32, #tpu.memory_space<vmem>>, vector<4x1xf32>
    %16 = vector.shape_cast %15 : vector<4x1xf32> to vector<4x1xf32>
    %17 = vector.broadcast %16 : vector<4x1xf32> to vector<4x256xf32>
    %18 = vector.extract_strided_slice %14 {offsets = [0, 0], sizes = [4, 1], strides = [1, 1]} : vector<4x5xf32> to vector<4x1xf32>
    %19 = vector.extract_strided_slice %13 {offsets = [0, 0], sizes = [1, 256], strides = [1, 1]} : vector<5x256xf32> to vector<1x256xf32>
    %20 = vector.broadcast %18 : vector<4x1xf32> to vector<4x256xf32>
    %21 = vector.broadcast %19 : vector<1x256xf32> to vector<4x256xf32>
    %22 = arith.mulf %20, %21 : vector<4x256xf32>
    %23 = arith.addf %17, %22 : vector<4x256xf32>
    %24 = vector.extract_strided_slice %14 {offsets = [0, 1], sizes = [4, 1], strides = [1, 1]} : vector<4x5xf32> to vector<4x1xf32>
    %25 = vector.extract_strided_slice %13 {offsets = [1, 0], sizes = [1, 256], strides = [1, 1]} : vector<5x256xf32> to vector<1x256xf32>
    %26 = vector.broadcast %24 : vector<4x1xf32> to vector<4x256xf32>
    %27 = vector.broadcast %25 : vector<1x256xf32> to vector<4x256xf32>
    %28 = arith.mulf %26, %27 : vector<4x256xf32>
    %29 = arith.addf %23, %28 : vector<4x256xf32>
    %30 = vector.extract_strided_slice %14 {offsets = [0, 2], sizes = [4, 1], strides = [1, 1]} : vector<4x5xf32> to vector<4x1xf32>
    %31 = vector.extract_strided_slice %13 {offsets = [2, 0], sizes = [1, 256], strides = [1, 1]} : vector<5x256xf32> to vector<1x256xf32>
    %32 = vector.broadcast %30 : vector<4x1xf32> to vector<4x256xf32>
    %33 = vector.broadcast %31 : vector<1x256xf32> to vector<4x256xf32>
    %34 = arith.mulf %32, %33 : vector<4x256xf32>
    %35 = arith.addf %29, %34 : vector<4x256xf32>
    %36 = vector.extract_strided_slice %14 {offsets = [0, 3], sizes = [4, 1], strides = [1, 1]} : vector<4x5xf32> to vector<4x1xf32>
    %37 = vector.extract_strided_slice %13 {offsets = [3, 0], sizes = [1, 256], strides = [1, 1]} : vector<5x256xf32> to vector<1x256xf32>
    %38 = vector.broadcast %36 : vector<4x1xf32> to vector<4x256xf32>
    %39 = vector.broadcast %37 : vector<1x256xf32> to vector<4x256xf32>
    %40 = arith.mulf %38, %39 : vector<4x256xf32>
    %41 = arith.addf %35, %40 : vector<4x256xf32>
    %42 = vector.extract_strided_slice %14 {offsets = [0, 4], sizes = [4, 1], strides = [1, 1]} : vector<4x5xf32> to vector<4x1xf32>
    %43 = vector.extract_strided_slice %13 {offsets = [4, 0], sizes = [1, 256], strides = [1, 1]} : vector<5x256xf32> to vector<1x256xf32>
    %44 = vector.broadcast %42 : vector<4x1xf32> to vector<4x256xf32>
    %45 = vector.broadcast %43 : vector<1x256xf32> to vector<4x256xf32>
    %46 = arith.mulf %44, %45 : vector<4x256xf32>
    %47 = arith.addf %41, %46 : vector<4x256xf32>
    %48 = arith.truncf %47 : vector<4x256xf32> to vector<4x256xbf16>
    %c0_10 = arith.constant 0 : index
    %c0_11 = arith.constant 0 : index
    %49 = vector.load %arg6[%c0_10, %c0_11] : memref<4x256xbf16, #tpu.memory_space<vmem>>, vector<4x256xbf16>
    tpu.vector_store %arg6[%c0_10, %c0_11], %48 {strides = array<i32>} : memref<4x256xbf16, #tpu.memory_space<vmem>>, vector<4x256xbf16>,
    return
  }
  func.func @transform_0(%arg0: i32) -> (i32, i32) {
    %c0_i32 = arith.constant 0 : i32
    %c0_i32_0 = arith.constant 0 : i32
    return %c0_i32, %arg0 : i32, i32
  }
  func.func @transform_1(%arg0: i32) -> (i32, i32) {
    %c0_i32 = arith.constant 0 : i32
    %c0_i32_0 = arith.constant 0 : i32
    %c0_i32_1 = arith.constant 0 : i32
    return %c0_i32, %c0_i32_0 : i32, i32
  }
  func.func @transform_2(%arg0: i32) -> (i32, i32) {
    %c0_i32 = arith.constant 0 : i32
    %c0_i32_0 = arith.constant 0 : i32
    %c0_i32_1 = arith.constant 0 : i32
    return %c0_i32, %c0_i32_0 : i32, i32
  }
  func.func @transform_3(%arg0: i32) -> (i32, i32) {
    %c0_i32 = arith.constant 0 : i32
    %c0_i32_0 = arith.constant 0 : i32
    %c0_i32_1 = arith.constant 0 : i32
    return %c0_i32, %c0_i32_0 : i32, i32
  }
  func.func @transform_4(%arg0: i32) -> (i32, i32) {
    %c0_i32 = arith.constant 0 : i32
    %c0_i32_0 = arith.constant 0 : i32
    %c0_i32_1 = arith.constant 0 : i32
    return %c0_i32, %c0_i32_0 : i32, i32
  }
  func.func @transform_5(%arg0: i32) -> (i32, i32) {
    %c0_i32 = arith.constant 0 : i32
    %c0_i32_0 = arith.constant 0 : i32
    return %c0_i32, %arg0 : i32, i32
  }
}

</mosaic_0001>

<llo_original>
// kernel: tpu_custom_call.1
$region0: #{tpu_custom_call.1}
  #allocation0 [shape = 'u32[]', space=smem, size = 0x4, offset = 0x4, fixed_abs, tag = 'smem constant byte address 0x4 - core index']
  #allocation1 [shape = 'u32[144,128]{1,0:T(1,128)}', space=vmem, size = 0x12000, scoped, tag = 'internal scratch']
  %s0 = inlined_call_operand.vmem [shape: f32[1,256], index: 0, kind: input, shape index: {}]
  %s1 = inlined_call_operand.vmem [shape: f32[5,1], index: 1, kind: input, shape index: {}]
  %s2 = inlined_call_operand.vmem [shape: f32[5,1], index: 2, kind: input, shape index: {}]
  %s3 = inlined_call_operand.vmem [shape: f32[4,5], index: 3, kind: input, shape index: {}]
  %s4 = inlined_call_operand.vmem [shape: f32[4,1], index: 4, kind: input, shape index: {}]
  %s5 = inlined_call_operand.hbm [shape: bf16[4,256], index: 5, kind: output, shape index: {}]
  %s6 = sld [smem:[#allocation0]]
  $region30: #{tpu_custom_call.1} parent=0
    _
  %s8 = ssub.s32 1, %s6
  %s9 = scalar_select 0, %s8, %s6
  $region1: #{tpu_custom_call.1} parent=0
    #allocation2 [shape = 'u8[2048]{0}', space=vmem, size = 0x800, scoped, tag = 'output window, operand 0, single buffered']
    #allocation3 [shape = 's32[1]{0}', space=sflag, size = 0x4, scoped, tag = 'scoped memory for tpu_custom_call.1']
    %10 = vsyncpa [#allocation3], 0
    // Predicated region
    $region2: #{tpu_custom_call.1} parent=1 // pred_check
      _
    $region3: #{tpu_custom_call.1} parent=1 // pred_check_branch
      %12 = sbr.rel (0) target = $region5
    $region4: #{tpu_custom_call.1} parent=1 // pred_region
      _
    $region5: #{tpu_custom_call.1} parent=1 // pred_fallthru
      _
    // Predicated region
    $region6: #{tpu_custom_call.1} parent=1 // pred_check
      _
    $region7: #{tpu_custom_call.1} parent=1 // pred_check_branch
      %14 = sbr.rel (0) target = $region9
    $region8: #{tpu_custom_call.1} parent=1 // pred_region
      _
    $region9: #{tpu_custom_call.1} parent=1 // pred_fallthru
      _
    // Predicated region
    $region10: #{tpu_custom_call.1} parent=1 // pred_check
      _
    $region11: #{tpu_custom_call.1} parent=1 // pred_check_branch
      %16 = sbr.rel (0) target = $region13
    $region12: #{tpu_custom_call.1} parent=1 // pred_region
      _
    $region13: #{tpu_custom_call.1} parent=1 // pred_fallthru
      _
    // Predicated region
    $region14: #{tpu_custom_call.1} parent=1 // pred_check
      _
    $region15: #{tpu_custom_call.1} parent=1 // pred_check_branch
      %18 = sbr.rel (0) target = $region17
    $region16: #{tpu_custom_call.1} parent=1 // pred_region
      _
    $region17: #{tpu_custom_call.1} parent=1 // pred_fallthru
      _
    // Predicated region
    $region18: #{tpu_custom_call.1} parent=1 // pred_check
      _
    $region19: #{tpu_custom_call.1} parent=1 // pred_check_branch
      %20 = sbr.rel (0) target = $region21
    $region20: #{tpu_custom_call.1} parent=1 // pred_region
      _
    $region21: #{tpu_custom_call.1} parent=1 // pred_fallthru
      _
    %v21 = vld [vmem:[%s0] sm:$0x3]
    %v22 = vld [vmem:[%s1] sm:$0x1f]
    %v23 = vld [vmem:[%s2] sm:$0x1f]
    %25 = vset.pattern.permute.xlu0 0
    %26 = vperm.xlu0 %25, %v23
    %v27 = vpop.permute.xlu0 %26
    %30 = vset.pattern.permute.xlu0 0
    %31 = vperm.xlu0 %30, %v22
    %v32 = vpop.permute.xlu0 %31
    %v35 = vlaneseq
    %v36 = vshrl.u32 %v35, 7
    %v37 = vsub.s32 0, %v36
    %v38 = vrot.slane %v21, %v37
    %v39 = vlaneseq
    %v40 = vshrl.u32 %v39, 7
    %v41 = vsub.s32 1, %v40
    %v42 = vrot.slane %v21, %v41
    %v45 = vmul.f32 %v32, %v38
    %v46 = vmul.f32 %v32, %v42
    %v47 = vadd.f32 %v27, %v45
    %v48 = vadd.f32 %v27, %v46
    %vm49 = vcmp.gt.f32.partialorder %v47, 0.0
    %vm50 = vcmp.gt.f32.partialorder %v48, 0.0
    %v51 = vmul.f32 %v47, 0.01
    %v52 = vmul.f32 %v48, 0.01
    %v53 = vsel %vm49, %v47, %v51
    %v54 = vsel %vm50, %v48, %v52
    %v55 = vld [vmem:[%s3] sm:$0xf]
    %v56 = vld [vmem:[%s4] sm:$0xf]
    %58 = vset.pattern.permute.xlu0 0
    %59 = vperm.xlu0 %58, %v56
    %v60 = vpop.permute.xlu0 %59
    %63 = vset.pattern.permute.xlu0 0
    %64 = vperm.xlu0 %63, %v55
    %v65 = vpop.permute.xlu0 %64
    %v67 = vlaneseq
    %v68 = vshrl.u32 %v67, 7
    %v69 = vsub.s32 0, %v68
    %v70 = vrot.slane %v53, %v69
    %v71 = vlaneseq
    %v72 = vshrl.u32 %v71, 7
    %v73 = vsub.s32 0, %v72
    %v74 = vrot.slane %v54, %v73
    %v75 = vmul.f32 %v65, %v70
    %v76 = vmul.f32 %v65, %v74
    %v77 = vadd.f32 %v60, %v75
    %v78 = vadd.f32 %v60, %v76
    %79 = vset.pattern.permute.xlu0 1
    %80 = vperm.xlu0 %79, %v55
    %v81 = vpop.permute.xlu0 %80
    %v83 = vlaneseq
    %v84 = vshrl.u32 %v83, 7
    %v85 = vsub.s32 1, %v84
    %v86 = vrot.slane %v53, %v85
    %v87 = vlaneseq
    %v88 = vshrl.u32 %v87, 7
    %v89 = vsub.s32 1, %v88
    %v90 = vrot.slane %v54, %v89
    %v91 = vmul.f32 %v81, %v86
    %v92 = vmul.f32 %v81, %v90
    %v93 = vadd.f32 %v77, %v91
    %v94 = vadd.f32 %v78, %v92
    %95 = vset.pattern.permute.xlu0 2
    %96 = vperm.xlu0 %95, %v55
    %v97 = vpop.permute.xlu0 %96
    %v99 = vlaneseq
    %v100 = vshrl.u32 %v99, 7
    %v101 = vsub.s32 2, %v100
    %v102 = vrot.slane %v53, %v101
    %v103 = vlaneseq
    %v104 = vshrl.u32 %v103, 7
    %v105 = vsub.s32 2, %v104
    %v106 = vrot.slane %v54, %v105
    %v107 = vmul.f32 %v97, %v102
    %v108 = vmul.f32 %v97, %v106
    %v109 = vadd.f32 %v93, %v107
    %v110 = vadd.f32 %v94, %v108
    %111 = vset.pattern.permute.xlu0 3
    %112 = vperm.xlu0 %111, %v55
    %v113 = vpop.permute.xlu0 %112
    %v115 = vlaneseq
    %v116 = vshrl.u32 %v115, 7
    %v117 = vsub.s32 3, %v116
    %v118 = vrot.slane %v53, %v117
    %v119 = vlaneseq
    %v120 = vshrl.u32 %v119, 7
    %v121 = vsub.s32 3, %v120
    %v122 = vrot.slane %v54, %v121
    %v123 = vmul.f32 %v113, %v118
    %v124 = vmul.f32 %v113, %v122
    %v125 = vadd.f32 %v109, %v123
    %v126 = vadd.f32 %v110, %v124
    %127 = vset.pattern.permute.xlu0 4
    %128 = vperm.xlu0 %127, %v55
    %v129 = vpop.permute.xlu0 %128
    %v131 = vlaneseq
    %v132 = vshrl.u32 %v131, 7
    %v133 = vsub.s32 4, %v132
    %v134 = vrot.slane %v53, %v133
    %v135 = vlaneseq
    %v136 = vshrl.u32 %v135, 7
    %v137 = vsub.s32 4, %v136
    %v138 = vrot.slane %v54, %v137
    %v139 = vmul.f32 %v129, %v134
    %v140 = vmul.f32 %v129, %v138
    %v141 = vadd.f32 %v125, %v139
    %v142 = vadd.f32 %v126, %v140
    %v143 = vpack.c.bf16 %v141, %v141
    %v144 = vpack.c.bf16 %v142, %v142
    %v147 = vcombine.low %v143, %v144
    %v149 = vunpack.c.l.s4 1983009808
    %v150 = vunpack.c.0.s8 %v149
    %v151 = vlaneseq
    %v152 = vshrl.u32 %v151, 7
    %v153 = vsub.s32 %v150, %v152
    %v154 = vrot.slane %v147, %v153
    %156 = vst [vmem:[#allocation2] sm:$0xf] %v154
    // Predicated region
    $region22: #{tpu_custom_call.1} parent=1 // pred_check
      _
    $region23: #{tpu_custom_call.1} parent=1 // pred_check_branch
      %158 = sbr.rel (0) target = $region25
    $region24: #{tpu_custom_call.1} parent=1 // pred_region
      %s160 = ssub.s32 64, 64
      %161 = vsyncadd [#allocation3], %s160
      %s163 = sshll.u32 [#allocation2], 4
      %s164 = int_to_ptr.vmem [resolvable:$true] %s163
      %166 = dma.vmem_to_hbm [thread:$0]  %s164, 64, %s5, [#allocation3]
    $region25: #{tpu_custom_call.1} parent=1 // pred_fallthru
      _
    // Predicated region
    $region26: #{tpu_custom_call.1} parent=1 // pred_check
      _
    $region27: #{tpu_custom_call.1} parent=1 // pred_check_branch
      %168 = sbr.rel (0) target = $region29
    $region28: #{tpu_custom_call.1} parent=1 // pred_region
      %169 = dma.done [#allocation3], 64
    $region29: #{tpu_custom_call.1} parent=1 // pred_fallthru
      _
    %170 = vsyncpa [#allocation3], 1

</llo_original>
